<compile_context>
chip_gen: v6e
topology: v6e:2x2x1
jax: 0.10.0
libtpu: 0.0.40
codegen_flags: <defaults>
</compile_context>

<pallas_src>
import jax
import jax.numpy as jnp
from jax.experimental import pallas as pl
from jax.experimental.pallas import tpu as pltpu


def make_positional_encoding(d_model: int, max_len: int = 5000,
                             dtype=jnp.float32) -> jnp.ndarray:
    """Deterministic sin/cos table, identical to the PyTorch __init__ (d_model even)."""
    position = jnp.arange(0, max_len, dtype=jnp.float32)[:, None]            # (L, 1)
    div_term = jnp.exp(
        jnp.arange(0, d_model, 2, dtype=jnp.float32)
        * (-jnp.log(jnp.float32(10000.0)) / d_model)
    )                                                                         # (D/2,)
    sin_part = jnp.sin(position * div_term)                                   # (L, D/2)
    cos_part = jnp.cos(position * div_term)                                   # (L, D/2)
    # interleave: pe[:, 0::2] = sin, pe[:, 1::2] = cos
    pe = jnp.stack([sin_part, cos_part], axis=-1).reshape(max_len, d_model)
    return pe.astype(dtype)


def _add_pe_kernel(x_ref, pe_ref, o_ref):
    # Identical block shapes -> one VPU add per vreg, unmasked lane-dense stores.
    o_ref[...] = x_ref[...] + pe_ref[...]


def _add_pe_bcast_kernel(x_ref, pe_ref, o_ref):
    # x: (TILE_B, R, C), pe: (R, C) resident across all grid steps.
    o_ref[...] = x_ref[...] + pe_ref[...][None, :, :]


def _per_buffer_budget_bytes() -> int:
    """Generation-aware per-buffer tile budget."""
    budget = 2 * 1024 * 1024          # safe everywhere: 3 operands x 2 bufs = 12 MiB
    try:
        vmem = int(getattr(pltpu.get_tpu_info(), "vmem_capacity_bytes", 0) or 0)
        # v7x-class parts have ~64 MiB VMEM per TC but 3.2 TB/s HBM: use bigger
        # tiles (4 MiB) to amortize the ~0.35us per-step overhead; footprint
        # 3 x 2 x 4 MiB = 24 MiB stays under the 32 MiB scoped limit.
        if 0 < vmem <= 80 * 1024 * 1024:
            budget = 4 * 1024 * 1024
    except Exception:
        pass
    return budget


def positional_encoding_forward(x: jnp.ndarray, pe_full: jnp.ndarray,
                                *, donate_x: bool = False) -> jnp.ndarray:
    """x: (B, S, D); pe_full: (max_len, D).  Returns x + pe_full[:S] (broadcast over B)."""
    B, S, D = x.shape
    max_len, d_pe = pe_full.shape
    if d_pe != D:
        raise ValueError(f"pe table d_model {d_pe} != input d_model {D}")
    if S > max_len:
        raise ValueError(f"sequence length {S} exceeds positional-encoding max_len {max_len}")

    # Tiny one-time slice + cast (avoids casting the whole 5000-row table and any
    # in-kernel upcast; halves pe traffic for bf16 activations).
    pe = pe_full[:S, :].astype(x.dtype)                                       # (S, D)
    itemsize = jnp.dtype(x.dtype).itemsize

    # ---- Choose a lane-dense (R, C) view of the per-batch (S, D) slab ----------
    if D % 128 == 0:
        R, C = S, D
    elif (S * D) % 128 == 0:
        F = S * D
        C = 128
        for cand in (1024, 512, 384, 256, 128):   # largest 128-multiple divisor of F
            if F % cand == 0:
                C = cand
                break
        R = F // C
    else:
        # Generic fallback: D < 128 and S*D not 128-aligned -> lane-masked stores.
        # Correct, known slow edge case.
        R, C = S, D

    x3 = x.reshape(B, R, C)
    pe2 = pe.reshape(R, C)

    budget = _per_buffer_budget_bytes()
    slab_bytes = R * C * itemsize
    vmem_limit = 32 * 1024 * 1024
    aliases = {0: 0} if donate_x else {}    # x not reused by caller -> reuse its HBM buffer

    if slab_bytes <= budget:
        # -------- Small per-batch slab: tile over batch, pe block resident --------
        tile_b = max(1, min(B, budget // slab_bytes))
        if B >= 2 and pl.cdiv(B, tile_b) < 2:
            tile_b = pl.cdiv(B, 2)          # expose >= 2 grid steps for v7x megacore
        grid = (pl.cdiv(B, tile_b),)
        out = pl.pallas_call(
            _add_pe_bcast_kernel,
            out_shape=jax.ShapeDtypeStruct((B, R, C), x.dtype),
            grid_spec=pltpu.PrefetchScalarGridSpec(
                num_scalar_prefetch=0,
                grid=grid,
                in_specs=[
                    pl.BlockSpec((tile_b, R, C), lambda b: (b, 0, 0)),
                    pl.BlockSpec((R, C), lambda b: (0, 0)),   # constant -> fetched once
                ],
                out_specs=pl.BlockSpec((tile_b, R, C), lambda b: (b, 0, 0)),
            ),
            compiler_params=pltpu.CompilerParams(
                dimension_semantics=("parallel",),
                vmem_limit_bytes=vmem_limit,
            ),
            input_output_aliases=aliases,
        )(x3, pe2)
        return out.reshape(B, S, D)

    # -------- Large slab: row-tile (R, C); row axis OUTER, batch INNER ------------
    # pe block index depends only on the outer axis, so across the inner batch
    # steps the same pe tile stays resident (no per-batch re-DMA of pe).
    rows_budget = max(8, (budget // (C * itemsize)) // 8 * 8)
    tile_r = min(R, rows_budget)
    grid = (pl.cdiv(R, tile_r), B)
    out = pl.pallas_call(
        _add_pe_kernel,
        out_shape=jax.ShapeDtypeStruct((B, R, C), x.dtype),
        grid_spec=pltpu.PrefetchScalarGridSpec(
            num_scalar_prefetch=0,
            grid=grid,
            in_specs=[
                pl.BlockSpec((pl.Squeezed(), tile_r, C), lambda r, b: (b, r, 0)),
                pl.BlockSpec((tile_r, C), lambda r, b: (r, 0)),
            ],
            out_specs=pl.BlockSpec((pl.Squeezed(), tile_r, C), lambda r, b: (b, r, 0)),
        ),
        compiler_params=pltpu.CompilerParams(
            dimension_semantics=("parallel", "parallel"),
            vmem_limit_bytes=vmem_limit,
        ),
        input_output_aliases=aliases,
    )(x3, pe2)
    return out.reshape(B, S, D)


if __name__ == "__main__":
    max_len = 5000
    key = jax.random.PRNGKey(0)

    def check(B, S, D):
        k = jax.random.fold_in(key, B * 1000003 + S * 131 + D)
        x = jax.random.normal(k, (B, S, D), dtype=jnp.float32)
        pe_full = make_positional_encoding(D, max_len, dtype=jnp.float32)
        out = jax.block_until_ready(positional_encoding_forward(x, pe_full))
        ref = x + pe_full[None, :S, :]
        assert out.shape == (B, S, D), f"shape mismatch at {(B, S, D)}"
        assert jnp.allclose(out, ref, atol=1e-6), f"value mismatch at {(B, S, D)}"

    # Module-implied small shapes: batch-first (B, S, D), D=32 -> lane-dense flattened view.
    check(2, 8, 32)
    # D a multiple of 128 -> batch-tiled broadcast path.
    check(2, 16, 128)
    # Larger shape exercising the row-tiled grid=(R_tiles, B) path (pe tile resident over batch).
    check(2, 4096, 512)
    # Non-128-aligned fallback (lane-masked stores, correctness only).
    check(2, 7, 48)

    print("KERNEL_OK")
</pallas_src>

<mosaic_0001>
module attributes {stable_mosaic.version = 11 : i64} {
  func.func @_add_pe_bcast_kernel(%arg0: i32, %arg1: memref<1x1x256xf32, #tpu.memory_space<vmem>>, %arg2: memref<1x256xf32, #tpu.memory_space<vmem>>, %arg3: memref<1x1x256xf32, #tpu.memory_space<vmem>>) attributes {dimension_semantics = [#tpu.dimension_semantics<parallel>], iteration_bounds = array<i64: 2>, scalar_prefetch = 0 : i64, scratch_operands = 0 : i64, tpu.core_type = #tpu.core_type<tc>, window_params = [{transform_indices = @transform_0, window_bounds = array<i64: 1, 1, 256>}, {pipeline_mode = #tpu.pipeline_mode<synchronous>, transform_indices = @transform_1, window_bounds = array<i64: 1, 256>}, {transform_indices = @transform_2, window_bounds = array<i64: 1, 1, 256>}]} {
    %c0 = arith.constant 0 : index
    %c0_0 = arith.constant 0 : index
    %c0_1 = arith.constant 0 : index
    %0 = vector.load %arg1[%c0, %c0_0, %c0_1] : memref<1x1x256xf32, #tpu.memory_space<vmem>>, vector<1x1x256xf32>
    %c0_2 = arith.constant 0 : index
    %c0_3 = arith.constant 0 : index
    %1 = vector.load %arg2[%c0_2, %c0_3] : memref<1x256xf32, #tpu.memory_space<vmem>>, vector<1x256xf32>
    %2 = vector.shape_cast %1 : vector<1x256xf32> to vector<1x1x256xf32>
    %3 = arith.addf %0, %2 : vector<1x1x256xf32>
    %c0_4 = arith.constant 0 : index
    %c0_5 = arith.constant 0 : index
    %c0_6 = arith.constant 0 : index
    %4 = vector.load %arg3[%c0_4, %c0_5, %c0_6] : memref<1x1x256xf32, #tpu.memory_space<vmem>>, vector<1x1x256xf32>
    tpu.vector_store %arg3[%c0_4, %c0_5, %c0_6], %3 {strides = array<i32>} : memref<1x1x256xf32, #tpu.memory_space<vmem>>, vector<1x1x256xf32>,
    return
  }
  func.func @transform_0(%arg0: i32) -> (i32, i32, i32) {
    %c0_i32 = arith.constant 0 : i32
    %c0_i32_0 = arith.constant 0 : i32
    %c0_i32_1 = arith.constant 0 : i32
    return %arg0, %c0_i32, %c0_i32_0 : i32, i32, i32
  }
  func.func @transform_1(%arg0: i32) -> (i32, i32) {
    %c0_i32 = arith.constant 0 : i32
    %c0_i32_0 = arith.constant 0 : i32
    %c0_i32_1 = arith.constant 0 : i32
    return %c0_i32, %c0_i32_0 : i32, i32
  }
  func.func @transform_2(%arg0: i32) -> (i32, i32, i32) {
    %c0_i32 = arith.constant 0 : i32
    %c0_i32_0 = arith.constant 0 : i32
    %c0_i32_1 = arith.constant 0 : i32
    return %arg0, %c0_i32, %c0_i32_0 : i32, i32, i32
  }
}

</mosaic_0001>

<llo_original>
// kernel: tpu_custom_call.1
$region0: #{tpu_custom_call.1}
  #allocation0 [shape = 'u32[]', space=smem, size = 0x4, offset = 0x4, fixed_abs, tag = 'smem constant byte address 0x4 - core index']
  #allocation1 [shape = 'u32[144,128]{1,0:T(1,128)}', space=vmem, size = 0x12000, scoped, tag = 'internal scratch']
  %s0 = inlined_call_operand.hbm [shape: f32[2,1,256], index: 0, kind: input, shape index: {}]
  %s1 = inlined_call_operand.hbm [shape: f32[1,256], index: 1, kind: input, shape index: {}]
  %s2 = inlined_call_operand.hbm [shape: f32[2,1,256], index: 2, kind: output, shape index: {}]
  %s3 = sld [smem:[#allocation0]]
  $region49: #{tpu_custom_call.1} parent=0
    _
  %s5 = ssub.s32 1, %s3
  %s6 = scalar_select 0, %s5, %s3
  $region1: #{tpu_custom_call.1} parent=0
    #allocation2 [shape = 'u8[2048]{0}', space=vmem, size = 0x800, scoped, tag = 'input window, operand 0']
    #allocation3 [shape = 's32[2]{0}', space=sflag, size = 0x8, scoped, tag = 'scoped memory for tpu_custom_call.1']
    #allocation4 [shape = 's32[2]{0}', space=sflag, size = 0x8, scoped, tag = 'scoped memory for tpu_custom_call.1']
    #allocation5 [shape = 'u8[1024]{0}', space=vmem, size = 0x400, scoped, tag = 'input window, operand 1, single buffered']
    #allocation6 [shape = 's32[1]{0}', space=sflag, size = 0x4, scoped, tag = 'scoped memory for tpu_custom_call.1']
    #allocation7 [shape = 'u8[2048]{0}', space=vmem, size = 0x800, scoped, tag = 'output window, operand 0']
    %7 = vsyncpa [#allocation3], 0
    %s8 = scalar_lea.sflag [#allocation3], 1
    %9 = vsyncpa %s8, 0
    %10 = vsyncpa [#allocation6], 0
    %11 = vsyncpa [#allocation4], 0
    %s12 = scalar_lea.sflag [#allocation4], 1
    %13 = vsyncpa %s12, 0
    loop: start=0, step=1, limit=4
    $region2: #{tpu_custom_call.1} parent=1 // loop_pre_header
      _
    $region3: #{tpu_custom_call.1} parent=1 // loop_header
      %s15 = sphi 0, %s19
      %p16 = scmp.ge.s32.totalorder %s15, 4
      %s25 = sphi 0, %s27
      %s28 = sphi 0, %s25
      %s29 = sphi 0, %s28
      %s45 = sphi 0, %s29
      %s49 = sphi 0, %s49
      %s51 = sphi 0, %s49
      %s52 = sphi 0, %s51
      %s66 = sphi 0, %s52
      %s72 = sphi 0, %s74
      %s75 = sphi 0, %s72
      %s76 = sphi 0, %s75
      %s92 = sphi 0, %s76
    $region4: #{tpu_custom_call.1} parent=1 // loop_header_branch
      %18 = sbr.rel (%p16) target = $region8
    $region5: #{tpu_custom_call.1} parent=1 // loop_body
      %s20 = ssub.s32 %s15, 1
      %s21 = ssub.s32 %s15, 2
      %s22 = sadd.s32 %s15, 1
      %s23 = ssub.s32 %s15, %s22
      %p24 = scmp.eq.s32.totalorder %s23, 0
      %s26 = sadd.s32 %s25, 1
      %s27 = scalar_select %p24, %s25, %s26
      %p30 = pneg %p24
      %p31 = scmp.eq.s32.totalorder %s15, 1
      %p32 = por %p30, %p31
      %p33 = scmp.ne.s32.totalorder %s25, %s28
      %p34 = scmp.eq.s32.totalorder %s15, 0
      %p35 = por %p33, %p34
      %p36 = scmp.ne.s32.totalorder %s25, %s28
      %p37 = scmp.eq.s32.totalorder %s20, 1
      %p38 = por %p36, %p37
      %p39 = scmp.ne.s32.totalorder %s28, %s29
      %p40 = scmp.eq.s32.totalorder %s20, 0
      %p41 = por %p39, %p40
      %p42 = scmp.ne.s32.totalorder %s28, %s29
      %p43 = scmp.eq.s32.totalorder %s21, 1
      %p44 = por %p42, %p43
      %p46 = scmp.ne.s32.totalorder %s29, %s45
      %p47 = scmp.eq.s32.totalorder %s21, 0
      %p48 = por %p46, %p47
      %s50 = sadd.s32 %s49, 1
      %p53 = scmp.eq.s32.totalorder %s15, 1
      %p54 = scmp.ne.s32.totalorder %s49, %s51
      %p55 = scmp.eq.s32.totalorder %s15, 0
      %p56 = por %p54, %p55
      %p57 = scmp.ne.s32.totalorder %s49, %s51
      %p58 = scmp.eq.s32.totalorder %s20, 1
      %p59 = por %p57, %p58
      %p60 = scmp.ne.s32.totalorder %s51, %s52
      %p61 = scmp.eq.s32.totalorder %s20, 0
      %p62 = por %p60, %p61
      %p63 = scmp.ne.s32.totalorder %s51, %s52
      %p64 = scmp.eq.s32.totalorder %s21, 1
      %p65 = por %p63, %p64
      %p67 = scmp.ne.s32.totalorder %s52, %s66
      %p68 = scmp.eq.s32.totalorder %s21, 0
      %p69 = por %p67, %p68
      %s70 = ssub.s32 %s15, %s22
      %p71 = scmp.eq.s32.totalorder %s70, 0
      %s73 = sadd.s32 %s72, 1
      %s74 = scalar_select %p71, %s72, %s73
      %p77 = pneg %p71
      %p78 = scmp.eq.s32.totalorder %s15, 1
      %p79 = por %p77, %p78
      %p80 = scmp.ne.s32.totalorder %s72, %s75
      %p81 = scmp.eq.s32.totalorder %s15, 0
      %p82 = por %p80, %p81
      %p83 = scmp.ne.s32.totalorder %s72, %s75
      %p84 = scmp.eq.s32.totalorder %s20, 1
      %p85 = por %p83, %p84
      %p86 = scmp.ne.s32.totalorder %s75, %s76
      %p87 = scmp.eq.s32.totalorder %s20, 0
      %p88 = por %p86, %p87
      %p89 = scmp.ne.s32.totalorder %s75, %s76
      %p90 = scmp.eq.s32.totalorder %s21, 1
      %p91 = por %p89, %p90
      %p93 = scmp.ne.s32.totalorder %s76, %s92
      %p94 = scmp.eq.s32.totalorder %s21, 0
      %p95 = por %p93, %p94
      %p96 = scmp.le.s32.totalorder 1, %s15
      %p97 = scmp.lt.s32.totalorder %s15, 3
      %p98 = pnand %p96, %p97
      %p99 = pneg %p98
      // Predicated region
      $region9: #{tpu_custom_call.1} parent=5 // pred_check
        _
      $region10: #{tpu_custom_call.1} parent=5 // pred_check_branch
        %101 = sbr.rel (%p98) target = $region12
      $region11: #{tpu_custom_call.1} parent=5 // pred_region
        %s102 = ssub.s32 %s15, 1
        // Predicated region
        $region13: #{tpu_custom_call.1} parent=11 // pred_check
          %p103 = pneg %p62
        $region14: #{tpu_custom_call.1} parent=11 // pred_check_branch
          %105 = sbr.rel (%p103) target = $region16
        $region15: #{tpu_custom_call.1} parent=11 // pred_region
          %s107 = ssub.s32 32, 32
          %108 = vsyncadd [#allocation6], %s107
          %s110 = sshll.u32 [#allocation5], 4
          %s111 = int_to_ptr.vmem [resolvable:$true] %s110
          %113 = dma.hbm_to_vmem [thread:$0]  %s1, 32, %s111, [#allocation6]
        $region16: #{tpu_custom_call.1} parent=11 // pred_fallthru
          _
      $region12: #{tpu_custom_call.1} parent=5 // pred_fallthru
        _
      %p114 = scmp.lt.s32.totalorder %s15, 2
      // Predicated region
      $region17: #{tpu_custom_call.1} parent=5 // pred_check
        %p115 = pneg %p114
      $region18: #{tpu_custom_call.1} parent=5 // pred_check_branch
        %117 = sbr.rel (%p115) target = $region20
      $region19: #{tpu_custom_call.1} parent=5 // pred_region
        // Predicated region
        $region21: #{tpu_custom_call.1} parent=19 // pred_check
          %p118 = pneg %p35
        $region22: #{tpu_custom_call.1} parent=19 // pred_check_branch
          %120 = sbr.rel (%p118) target = $region24
        $region23: #{tpu_custom_call.1} parent=19 // pred_region
          %s121 = sand.u32 %s25, 1
          %s122 = scalar_lea.sflag [#allocation3], %s121
          %s123 = sand.u32 %s25, 1
          %s124 = smul.addr %s123, 2
          %s125 = scalar_lea.vmem [#allocation2], %s124
          %s127 = ssub.s32 32, 32
          %128 = vsyncadd %s122, %s127
          %s129 = smul.addr %s15, 2
          %s130 = smul.addr %s129, 16
          %s131 = scalar_lea.hbm %s0, %s130
          %s133 = sshll.u32 %s125, 4
          %s134 = int_to_ptr.vmem [resolvable:$true] %s133
          %136 = dma.hbm_to_vmem [thread:$0]  %s131, 32, %s134, %s122
        $region24: #{tpu_custom_call.1} parent=19 // pred_fallthru
          _
      $region20: #{tpu_custom_call.1} parent=5 // pred_fallthru
        _
      %p137 = scmp.le.s32.totalorder 1, %s15
      %p138 = scmp.lt.s32.totalorder %s15, 3
      %p139 = pnand %p137, %p138
      %p140 = pneg %p139
      // Predicated region
      $region25: #{tpu_custom_call.1} parent=5 // pred_check
        _
      $region26: #{tpu_custom_call.1} parent=5 // pred_check_branch
        %142 = sbr.rel (%p139) target = $region28
      $region27: #{tpu_custom_call.1} parent=5 // pred_region
        %s143 = ssub.s32 %s15, 1
        %s144 = sand.u32 %s28, 1
        %s145 = scalar_lea.sflag [#allocation3], %s144
        %s146 = sand.u32 %s28, 1
        %s147 = smul.addr %s146, 2
        %s148 = scalar_lea.vmem [#allocation2], %s147
        // Predicated region
        $region29: #{tpu_custom_call.1} parent=27 // pred_check
          %p149 = pneg %p41
        $region30: #{tpu_custom_call.1} parent=27 // pred_check_branch
          %151 = sbr.rel (%p149) target = $region32
        $region31: #{tpu_custom_call.1} parent=27 // pred_region
          %152 = dma.done %s145, 32
        $region32: #{tpu_custom_call.1} parent=27 // pred_fallthru
          _
        // Predicated region
        $region33: #{tpu_custom_call.1} parent=27 // pred_check
          %p153 = pneg %p62
        $region34: #{tpu_custom_call.1} parent=27 // pred_check_branch
          %155 = sbr.rel (%p153) target = $region36
        $region35: #{tpu_custom_call.1} parent=27 // pred_region
          %156 = dma.done [#allocation6], 32
        $region36: #{tpu_custom_call.1} parent=27 // pred_fallthru
          _
        %s157 = sand.u32 %s28, 1
        %s158 = scalar_lea.sflag [#allocation3], %s157
        %s159 = sand.u32 %s28, 1
        %s160 = smul.addr %s159, 2
        %s161 = scalar_lea.vmem [#allocation2], %s160
        %p162 = pneg %p41
        %p163 = pneg %p38
        %p164 = pneg %p62
        %p165 = pneg %p59
        %p166 = pneg %p88
        %p167 = pneg %p85
        %s168 = sand.u32 %s75, 1
        %s169 = scalar_lea.sflag [#allocation4], %s168
        %s170 = sand.u32 %s75, 1
        %s171 = smul.addr %s170, 2
        %s172 = scalar_lea.vmem [#allocation7], %s171
        %v173 = vld [vmem:[%s148] sm:$0x3]
        %v174 = vld [vmem:[#allocation5] sm:$0x3]
        %v175 = vadd.f32 %v173, %v174
        %v176 = vlaneseq
        %vm177 = vcmp.ge.s32.totalorder %v176, 0
        %vm178 = vcmp.lt.s32.totalorder %v176, 256
        %vm179 = vmand %vm177, %vm178
        %180 = vst.msk [vmem:[%s172] sm:$0x3] %vm179, %v175
        %s181 = sand.u32 %s75, 1
        %s182 = scalar_lea.sflag [#allocation4], %s181
        %s183 = sand.u32 %s75, 1
        %s184 = smul.addr %s183, 2
        %s185 = scalar_lea.vmem [#allocation7], %s184
        // Predicated region
        $region37: #{tpu_custom_call.1} parent=27 // pred_check
          %p186 = pneg %p85
        $region38: #{tpu_custom_call.1} parent=27 // pred_check_branch
          %188 = sbr.rel (%p186) target = $region40
        $region39: #{tpu_custom_call.1} parent=27 // pred_region
          %s190 = ssub.s32 32, 32
          %191 = vsyncadd %s182, %s190
          %s192 = smul.addr %s20, 2
          %s193 = smul.addr %s192, 16
          %s194 = scalar_lea.hbm %s2, %s193
          %s196 = sshll.u32 %s185, 4
          %s197 = int_to_ptr.vmem [resolvable:$true] %s196
          %199 = dma.vmem_to_hbm [thread:$0]  %s197, 32, %s194, %s182
        $region40: #{tpu_custom_call.1} parent=27 // pred_fallthru
          _
      $region28: #{tpu_custom_call.1} parent=5 // pred_fallthru
        _
      %p200 = scmp.le.s32.totalorder 2, %s15
      // Predicated region
      $region41: #{tpu_custom_call.1} parent=5 // pred_check
        %p201 = pneg %p200
      $region42: #{tpu_custom_call.1} parent=5 // pred_check_branch
        %203 = sbr.rel (%p201) target = $region44
      $region43: #{tpu_custom_call.1} parent=5 // pred_region
        %s204 = ssub.s32 %s15, 2
        // Predicated region
        $region45: #{tpu_custom_call.1} parent=43 // pred_check
          %p205 = pneg %p91
        $region46: #{tpu_custom_call.1} parent=43 // pred_check_branch
          %207 = sbr.rel (%p205) target = $region48
        $region47: #{tpu_custom_call.1} parent=43 // pred_region
          %s208 = sand.u32 %s76, 1
          %s209 = scalar_lea.sflag [#allocation4], %s208
          %s210 = sand.u32 %s76, 1
          %s211 = smul.addr %s210, 2
          %s212 = scalar_lea.vmem [#allocation7], %s211
          %213 = dma.done %s209, 32
        $region48: #{tpu_custom_call.1} parent=43 // pred_fallthru
          _
      $region44: #{tpu_custom_call.1} parent=5 // pred_fallthru
        _
    $region6: #{tpu_custom_call.1} parent=1 // loop_footer
      %s19 = sadd.s32 1, %s15
    $region7: #{tpu_custom_call.1} parent=1 // loop_footer_branch
      %14 = sbr.rel target = $region3
    $region8: #{tpu_custom_call.1} parent=1 // loop_exit
      _
    %214 = vsyncpa [#allocation3], 1
    %s215 = scalar_lea.sflag [#allocation3], 1
    %216 = vsyncpa %s215, 1
    %217 = vsyncpa [#allocation6], 1
    %218 = vsyncpa [#allocation4], 1
    %s219 = scalar_lea.sflag [#allocation4], 1
    %220 = vsyncpa %s219, 1

</llo_original>
